<compile_context>
chip_gen: v6e
topology: v6e:2x2x1
jax: 0.10.0
libtpu: 0.0.40
codegen_flags: <defaults>
</compile_context>

<pallas_src>
import functools

import jax
import jax.numpy as jnp
from jax import lax
from jax.experimental import pallas as pl
from jax.experimental.pallas import tpu as pltpu


def _round_up(x, m):
    return ((x + m - 1) // m) * m


def _vfl_kernel(pred_ref, gt_ref, label_ref, out_ref, *,
                alpha, gamma, rows_valid, approx_recip):
    p = pl.program_id(0)
    k = pl.program_id(1)
    k_steps = pl.num_programs(1)

    @pl.when(k == 0)
    def _init():
        out_ref[...] = jnp.zeros_like(out_ref)

    x = pred_ref[...].astype(jnp.float32)      # logits
    y = gt_ref[...].astype(jnp.float32)        # soft targets (gt_score)
    lab = label_ref[...].astype(jnp.float32)   # hard labels

    # Share one exp(-|x|) between sigmoid and the stable BCE log term.
    e = jnp.exp(-jnp.abs(x))                   # exp(-|x|) in (0, 1]
    log1p_e = jnp.log1p(e)                     # softplus(-|x|)
    inv = pl.reciprocal(1.0 + e, approx=approx_recip)
    sig = jnp.where(x >= 0.0, inv, e * inv)    # numerically stable sigmoid(x)

    # Integer-gamma fast path: avoid pow's exp(gamma*log(sig)) on the EUP.
    g = float(gamma)
    if g.is_integer() and 0.0 <= g <= 8.0:
        sig_pow = jnp.ones_like(sig)
        for _ in range(int(g)):
            sig_pow = sig_pow * sig
    else:
        sig_pow = sig ** g

    weight = alpha * sig_pow * (1.0 - lab) + y * lab
    # BCE with logits, reduction='none': max(x,0) - x*y + log1p(exp(-|x|))
    bce = jnp.maximum(x, 0.0) - x * y + log1p_e
    contrib = bce * weight                     # (tile_r, lane), all terms >= 0

    tile_r, lane = contrib.shape
    # Unclamped row offset of this block (index_map may clamp the DMA, but the
    # mask below must use the logical offset so duplicated rows contribute 0).
    row0 = (p * k_steps + k) * tile_r

    def accumulate(c):
        # Fold rows into the resident (8, lane) output block: pure VALU vreg
        # adds (the reshape splits rows on (8,128)-tile boundaries, no XLU).
        out_ref[...] += c.reshape(tile_r // 8, 8, lane).sum(axis=0)

    is_interior = row0 + tile_r <= rows_valid

    @pl.when(is_interior)
    def _interior():
        accumulate(contrib)

    @pl.when(jnp.logical_not(is_interior))
    def _boundary():
        # Only the boundary (or rare clamped-duplicate) block pays for the
        # per-element row mask.
        rows = lax.broadcasted_iota(jnp.int32, contrib.shape, 0) + row0
        accumulate(jnp.where(rows < rows_valid, contrib, 0.0))


def varifocal_loss(pred_score, gt_score, label, alpha=0.75, gamma=2.0, *,
                   lane=512, max_tile_rows=2048, parallel=2, approx_recip=False):
    """pred_score, gt_score, label: (B, N, C). Returns scalar loss (float32).

    label may be int8/bool/bf16 and gt_score bf16 to reduce HBM traffic; the
    kernel upcasts to f32 in VMEM.
    """
    assert pred_score.shape == gt_score.shape == label.shape
    B, N, C = pred_score.shape
    T = B * N * C

    # ---- layout plumbing: flatten to a lane-dense (R, lane) slab -------------
    pred = pred_score.reshape(-1)
    gt = gt_score.reshape(-1)
    lab = label.reshape(-1)

    # Minimal padding, only if T is not lane-aligned. Padding with
    # (pred=0, gt=0, label=1) gives weight == 0 -> exactly zero contribution.
    T_pad = _round_up(T, lane)
    if T_pad != T:
        # TODO(synk): try CompilerParams(allow_input_fusion=...) so XLA fuses
        # this pad into the kernel's input fetch instead of materializing copies.
        pad = T_pad - T
        pred = jnp.pad(pred, (0, pad))
        gt = jnp.pad(gt, (0, pad))
        lab = jnp.pad(lab, (0, pad), constant_values=1)

    R = T_pad // lane
    pred = pred.reshape(R, lane)
    gt = gt.reshape(R, lane)
    lab = lab.reshape(R, lane)

    # ---- tiling ---------------------------------------------------------------
    # Sublane multiple for the row tile: 8 for 4-byte dtypes, 16 for bf16,
    # 32 for int8/bool (packing constraint).
    min_itemsize = min(int(jnp.dtype(a.dtype).itemsize) for a in (pred, gt, lab))
    sub = 8 * max(1, 4 // max(min_itemsize, 1))

    P = int(parallel)
    tile_r = min(_round_up(int(max_tile_rows), sub),
                 _round_up(max(pl.cdiv(R, P), 1), sub))
    K = pl.cdiv(R, P * tile_r)          # sequential steps per parallel slice
    nb = pl.cdiv(R, tile_r)             # number of real row-blocks (for clamp)

    def in_map(p, k):
        # Clamp the (rare, unbalanced-tail) fully-out-of-range block index; the
        # boundary branch in the kernel zeroes its contribution via the
        # *unclamped* row offset, so clamping never double-counts.
        return (jnp.minimum(p * K + k, nb - 1), 0)

    in_spec = pl.BlockSpec((tile_r, lane), in_map)
    # Output block doubles as the per-slice accumulator (resident over k).
    out_spec = pl.BlockSpec((8, lane), lambda p, k: (p, 0))

    kernel = functools.partial(
        _vfl_kernel, alpha=float(alpha), gamma=float(gamma),
        rows_valid=R, approx_recip=bool(approx_recip))

    in_bytes = sum(int(a.size) * int(jnp.dtype(a.dtype).itemsize)
                   for a in (pred, gt, lab))
    out_bytes = P * 8 * lane * 4
    cost = pl.CostEstimate(flops=20 * T, transcendentals=2 * T,
                           bytes_accessed=in_bytes + out_bytes)

    tile_in_bytes = tile_r * lane * sum(int(jnp.dtype(a.dtype).itemsize)
                                        for a in (pred, gt, lab))
    # 2x double-buffered inputs + margin; cap at 48 MiB (v7x has 64 MiB VMEM).
    vmem_limit = min(48 << 20, max(32 << 20, 2 * tile_in_bytes + (8 << 20)))

    partials = pl.pallas_call(
        kernel,
        out_shape=jax.ShapeDtypeStruct((P * 8, lane), jnp.float32),
        grid_spec=pltpu.PrefetchScalarGridSpec(
            num_scalar_prefetch=0,
            grid=(P, K),
            in_specs=[in_spec, in_spec, in_spec],
            out_specs=out_spec,
        ),
        compiler_params=pltpu.CompilerParams(
            dimension_semantics=("parallel", "arbitrary"),
            vmem_limit_bytes=int(vmem_limit),
        ),
        cost_estimate=cost,
    )(pred, gt, lab)

    # .mean(1) then .sum()  ==  global sum / N
    return jnp.sum(partials) / jnp.float32(N)


def varifocal_loss_ref(pred_score, gt_score, label, alpha=0.75, gamma=2.0):
    """Pure-JAX reference mirroring the PyTorch forward."""
    x = pred_score.astype(jnp.float32)
    y = gt_score.astype(jnp.float32)
    lab = label.astype(jnp.float32)
    weight = alpha * jax.nn.sigmoid(x) ** gamma * (1.0 - lab) + y * lab
    bce = jnp.maximum(x, 0.0) - x * y + jnp.log1p(jnp.exp(-jnp.abs(x)))
    return (bce * weight).mean(axis=1).sum()


if __name__ == "__main__":
    key = jax.random.PRNGKey(0)

    # Small, lane-aligned shapes (T = 2*64*16 = 2048 -> no pad copy).
    B, N, C = 2, 64, 16
    k1, k2, k3 = jax.random.split(key, 3)
    pred_score = jax.random.normal(k1, (B, N, C), dtype=jnp.float32) * 2.0
    gt_score = jax.random.uniform(k2, (B, N, C), dtype=jnp.float32)
    label = (jax.random.uniform(k3, (B, N, C)) > 0.9).astype(jnp.float32)

    loss = jax.block_until_ready(varifocal_loss(pred_score, gt_score, label))
    ref = varifocal_loss_ref(pred_score, gt_score, label)
    assert jnp.allclose(loss, ref, rtol=1e-4, atol=1e-4), (loss, ref)

    # Ragged shapes: exercises the minimal lane pad + in-kernel boundary mask.
    B2, N2, C2 = 2, 67, 13
    k4, k5, k6 = jax.random.split(jax.random.PRNGKey(1), 3)
    p2 = jax.random.normal(k4, (B2, N2, C2), dtype=jnp.float32)
    g2 = jax.random.uniform(k5, (B2, N2, C2), dtype=jnp.float32)
    l2 = (jax.random.uniform(k6, (B2, N2, C2)) > 0.8).astype(jnp.float32)

    loss2 = jax.block_until_ready(varifocal_loss(p2, g2, l2))
    ref2 = varifocal_loss_ref(p2, g2, l2)
    assert jnp.allclose(loss2, ref2, rtol=1e-4, atol=1e-4), (loss2, ref2)

    print("KERNEL_OK")
</pallas_src>

<mosaic_0001>
module attributes {stable_mosaic.version = 11 : i64} {
  func.func @_vfl_kernel(%arg0: i32, %arg1: i32, %arg2: memref<8x512xf32, #tpu.memory_space<vmem>>, %arg3: memref<8x512xf32, #tpu.memory_space<vmem>>, %arg4: memref<8x512xf32, #tpu.memory_space<vmem>>, %arg5: memref<8x512xf32, #tpu.memory_space<vmem>>) attributes {dimension_semantics = [#tpu.dimension_semantics<parallel>, #tpu.dimension_semantics<arbitrary>], iteration_bounds = array<i64: 2, 1>, scalar_prefetch = 0 : i64, scratch_operands = 0 : i64, tpu.core_type = #tpu.core_type<tc>, window_params = [{transform_indices = @transform_0, window_bounds = array<i64: 8, 512>}, {transform_indices = @transform_1, window_bounds = array<i64: 8, 512>}, {transform_indices = @transform_2, window_bounds = array<i64: 8, 512>}, {transform_indices = @transform_3, window_bounds = array<i64: 8, 512>}]} {
    %c0_i32 = arith.constant 0 : i32
    %0 = arith.cmpi eq, %arg1, %c0_i32 : i32
    %1 = arith.extui %0 : i1 to i32
    %c0_i32_0 = arith.constant 0 : i32
    %2 = arith.cmpi ne, %1, %c0_i32_0 : i32
    scf.if %2 {
      %cst_15 = arith.constant 0.000000e+00 : f32
      %44 = vector.broadcast %cst_15 : f32 to vector<8x512xf32>
      %c0_16 = arith.constant 0 : index
      %c0_17 = arith.constant 0 : index
      %45 = vector.load %arg5[%c0_16, %c0_17] : memref<8x512xf32, #tpu.memory_space<vmem>>, vector<8x512xf32>
      tpu.vector_store %arg5[%c0_16, %c0_17], %44 {strides = array<i32>} : memref<8x512xf32, #tpu.memory_space<vmem>>, vector<8x512xf32>,
    } else {
    }
    %c0 = arith.constant 0 : index
    %c0_1 = arith.constant 0 : index
    %3 = vector.load %arg2[%c0, %c0_1] : memref<8x512xf32, #tpu.memory_space<vmem>>, vector<8x512xf32>
    %c0_2 = arith.constant 0 : index
    %c0_3 = arith.constant 0 : index
    %4 = vector.load %arg3[%c0_2, %c0_3] : memref<8x512xf32, #tpu.memory_space<vmem>>, vector<8x512xf32>
    %c0_4 = arith.constant 0 : index
    %c0_5 = arith.constant 0 : index
    %5 = vector.load %arg4[%c0_4, %c0_5] : memref<8x512xf32, #tpu.memory_space<vmem>>, vector<8x512xf32>
    %6 = math.absf %3 : vector<8x512xf32>
    %cst = arith.constant 0.000000e+00 : f32
    %7 = vector.broadcast %cst : f32 to vector<8x512xf32>
    %8 = arith.subf %7, %6 : vector<8x512xf32>
    %9 = math.exp %8 : vector<8x512xf32>
    %10 = math.log1p %9 : vector<8x512xf32>
    %cst_6 = arith.constant 1.000000e+00 : f32
    %11 = vector.broadcast %cst_6 : f32 to vector<8x512xf32>
    %12 = arith.addf %11, %9 : vector<8x512xf32>
    %13 = tpu.reciprocal %12 : vector<8x512xf32> -> vector<8x512xf32>
    %cst_7 = arith.constant 0.000000e+00 : f32
    %14 = vector.broadcast %cst_7 : f32 to vector<8x512xf32>
    %15 = arith.cmpf oge, %3, %14 : vector<8x512xf32>
    %16 = arith.mulf %9, %13 : vector<8x512xf32>
    %17 = arith.select %15, %13, %16 : vector<8x512xi1>, vector<8x512xf32>
    %cst_8 = arith.constant 1.000000e+00 : f32
    %18 = vector.broadcast %cst_8 : f32 to vector<8x512xf32>
    %19 = arith.mulf %18, %17 : vector<8x512xf32>
    %20 = arith.mulf %19, %17 : vector<8x512xf32>
    %cst_9 = arith.constant 7.500000e-01 : f32
    %21 = vector.broadcast %cst_9 : f32 to vector<8x512xf32>
    %22 = arith.mulf %21, %20 : vector<8x512xf32>
    %cst_10 = arith.constant 1.000000e+00 : f32
    %23 = vector.broadcast %cst_10 : f32 to vector<8x512xf32>
    %24 = arith.subf %23, %5 : vector<8x512xf32>
    %25 = arith.mulf %22, %24 : vector<8x512xf32>
    %26 = arith.mulf %4, %5 : vector<8x512xf32>
    %27 = arith.addf %25, %26 : vector<8x512xf32>
    %cst_11 = arith.constant 0.000000e+00 : f32
    %28 = vector.broadcast %cst_11 : f32 to vector<8x512xf32>
    %29 = arith.maximumf %3, %28 : vector<8x512xf32>
    %30 = arith.mulf %3, %4 : vector<8x512xf32>
    %31 = arith.subf %29, %30 : vector<8x512xf32>
    %32 = arith.addf %31, %10 : vector<8x512xf32>
    %33 = arith.mulf %32, %27 : vector<8x512xf32>
    %c1_i32 = arith.constant 1 : i32
    %34 = arith.muli %arg0, %c1_i32 : i32
    %35 = arith.addi %34, %arg1 : i32
    %c8_i32 = arith.constant 8 : i32
    %36 = arith.muli %35, %c8_i32 : i32
    %c8_i32_12 = arith.constant 8 : i32
    %37 = arith.addi %36, %c8_i32_12 : i32
    %c4_i32 = arith.constant 4 : i32
    %38 = arith.cmpi sle, %37, %c4_i32 : i32
    %39 = arith.extui %38 : i1 to i32
    %c0_i32_13 = arith.constant 0 : i32
    %40 = arith.cmpi ne, %39, %c0_i32_13 : i32
    scf.if %40 {
      %c0_15 = arith.constant 0 : index
      %c0_16 = arith.constant 0 : index
      %44 = vector.load %arg5[%c0_15, %c0_16] : memref<8x512xf32, #tpu.memory_space<vmem>>, vector<8x512xf32>
      %45 = vector.shape_cast %33 : vector<8x512xf32> to vector<1x8x512xf32>
      %cst_17 = arith.constant dense<0.000000e+00> : vector<8x512xf32>
      %46 = vector.multi_reduction <add>, %45, %cst_17 [0] : vector<1x8x512xf32> to vector<8x512xf32>
      %47 = arith.addf %44, %46 : vector<8x512xf32>
      %c0_18 = arith.constant 0 : index
      %c0_19 = arith.constant 0 : index
      %48 = vector.load %arg5[%c0_18, %c0_19] : memref<8x512xf32, #tpu.memory_space<vmem>>, vector<8x512xf32>
      tpu.vector_store %arg5[%c0_18, %c0_19], %47 {strides = array<i32>} : memref<8x512xf32, #tpu.memory_space<vmem>>, vector<8x512xf32>,
    } else {
    }
    %true = arith.constant true
    %41 = arith.xori %38, %true : i1
    %42 = arith.extui %41 : i1 to i32
    %c0_i32_14 = arith.constant 0 : i32
    %43 = arith.cmpi ne, %42, %c0_i32_14 : i32
    scf.if %43 {
      %44 = tpu.iota {dimensions = array<i32: 0>} : vector<8x512xi32>
      %45 = vector.broadcast %36 : i32 to vector<8x512xi32>
      %46 = arith.addi %44, %45 : vector<8x512xi32>
      %c4_i32_15 = arith.constant 4 : i32
      %47 = vector.broadcast %c4_i32_15 : i32 to vector<8x512xi32>
      %48 = arith.cmpi slt, %46, %47 : vector<8x512xi32>
      %cst_16 = arith.constant 0.000000e+00 : f32
      %49 = vector.broadcast %cst_16 : f32 to vector<8x512xf32>
      %50 = arith.select %48, %33, %49 : vector<8x512xi1>, vector<8x512xf32>
      %c0_17 = arith.constant 0 : index
      %c0_18 = arith.constant 0 : index
      %51 = vector.load %arg5[%c0_17, %c0_18] : memref<8x512xf32, #tpu.memory_space<vmem>>, vector<8x512xf32>
      %52 = vector.shape_cast %50 : vector<8x512xf32> to vector<1x8x512xf32>
      %cst_19 = arith.constant dense<0.000000e+00> : vector<8x512xf32>
      %53 = vector.multi_reduction <add>, %52, %cst_19 [0] : vector<1x8x512xf32> to vector<8x512xf32>
      %54 = arith.addf %51, %53 : vector<8x512xf32>
      %c0_20 = arith.constant 0 : index
      %c0_21 = arith.constant 0 : index
      %55 = vector.load %arg5[%c0_20, %c0_21] : memref<8x512xf32, #tpu.memory_space<vmem>>, vector<8x512xf32>
      tpu.vector_store %arg5[%c0_20, %c0_21], %54 {strides = array<i32>} : memref<8x512xf32, #tpu.memory_space<vmem>>, vector<8x512xf32>,
    } else {
    }
    return
  }
  func.func @transform_0(%arg0: i32, %arg1: i32) -> (i32, i32) {
    %c1_i32 = arith.constant 1 : i32
    %0 = arith.muli %arg0, %c1_i32 : i32
    %1 = arith.addi %0, %arg1 : i32
    %c0_i32 = arith.constant 0 : i32
    %2 = arith.minsi %1, %c0_i32 : i32
    %c0_i32_0 = arith.constant 0 : i32
    %c0_i32_1 = arith.constant 0 : i32
    return %2, %c0_i32_0 : i32, i32
  }
  func.func @transform_1(%arg0: i32, %arg1: i32) -> (i32, i32) {
    %c1_i32 = arith.constant 1 : i32
    %0 = arith.muli %arg0, %c1_i32 : i32
    %1 = arith.addi %0, %arg1 : i32
    %c0_i32 = arith.constant 0 : i32
    %2 = arith.minsi %1, %c0_i32 : i32
    %c0_i32_0 = arith.constant 0 : i32
    %c0_i32_1 = arith.constant 0 : i32
    return %2, %c0_i32_0 : i32, i32
  }
  func.func @transform_2(%arg0: i32, %arg1: i32) -> (i32, i32) {
    %c1_i32 = arith.constant 1 : i32
    %0 = arith.muli %arg0, %c1_i32 : i32
    %1 = arith.addi %0, %arg1 : i32
    %c0_i32 = arith.constant 0 : i32
    %2 = arith.minsi %1, %c0_i32 : i32
    %c0_i32_0 = arith.constant 0 : i32
    %c0_i32_1 = arith.constant 0 : i32
    return %2, %c0_i32_0 : i32, i32
  }
  func.func @transform_3(%arg0: i32, %arg1: i32) -> (i32, i32) {
    %c0_i32 = arith.constant 0 : i32
    %c0_i32_0 = arith.constant 0 : i32
    return %arg0, %c0_i32 : i32, i32
  }
}

</mosaic_0001>

<llo_original>
// kernel: tpu_custom_call.1
$region0: #{tpu_custom_call.1}
  #allocation0 [shape = 'u32[]', space=smem, size = 0x4, offset = 0x4, fixed_abs, tag = 'smem constant byte address 0x4 - core index']
  #allocation1 [shape = 'u32[144,128]{1,0:T(1,128)}', space=vmem, size = 0x12000, scoped, tag = 'internal scratch']
  %s0 = inlined_call_operand.hbm [shape: f32[4,512], index: 0, kind: input, shape index: {}]
  %s1 = inlined_call_operand.hbm [shape: f32[4,512], index: 1, kind: input, shape index: {}]
  %s2 = inlined_call_operand.hbm [shape: f32[4,512], index: 2, kind: input, shape index: {}]
  %s3 = inlined_call_operand.hbm [shape: f32[16,512], index: 3, kind: output, shape index: {}]
  %s4 = sld [smem:[#allocation0]]
  $region69: #{tpu_custom_call.1} parent=0
    _
  %s6 = ssub.s32 1, %s4
  %s7 = scalar_select 0, %s6, %s4
  $region1: #{tpu_custom_call.1} parent=0
    #allocation2 [shape = 'u8[32768]{0}', space=vmem, size = 0x8000, scoped, tag = 'input window, operand 0']
    #allocation3 [shape = 's32[2]{0}', space=sflag, size = 0x8, scoped, tag = 'scoped memory for tpu_custom_call.1']
    #allocation4 [shape = 's32[2]{0}', space=sflag, size = 0x8, scoped, tag = 'scoped memory for tpu_custom_call.1']
    #allocation5 [shape = 'u8[32768]{0}', space=vmem, size = 0x8000, scoped, tag = 'input window, operand 1']
    #allocation6 [shape = 's32[2]{0}', space=sflag, size = 0x8, scoped, tag = 'scoped memory for tpu_custom_call.1']
    #allocation7 [shape = 'u8[32768]{0}', space=vmem, size = 0x8000, scoped, tag = 'input window, operand 2']
    #allocation8 [shape = 'u8[32768]{0}', space=vmem, size = 0x8000, scoped, tag = 'output window, operand 0']
    %8 = vsyncpa [#allocation3], 0
    %s9 = scalar_lea.sflag [#allocation3], 1
    %10 = vsyncpa %s9, 0
    %11 = vsyncpa [#allocation6], 0
    %s12 = scalar_lea.sflag [#allocation6], 1
    %13 = vsyncpa %s12, 0
    %14 = vsyncpa [#allocation4], 0
    %s15 = scalar_lea.sflag [#allocation4], 1
    %16 = vsyncpa %s15, 0
    loop: start=0, step=1, limit=4
    $region2: #{tpu_custom_call.1} parent=1 // loop_pre_header
      _
    $region3: #{tpu_custom_call.1} parent=1 // loop_header
      %s18 = sphi 0, %s22
      %p19 = scmp.ge.s32.totalorder %s18, 4
      %s25 = sphi 0, %s37
      %s26 = sphi 0, %s33
      %s27 = sphi 0, %s25
      %s28 = sphi 0, %s26
      %s29 = sphi 0, %s27
      %s30 = sphi 0, %s28
      %s46 = sphi 0, %s48
      %s49 = sphi 0, %s46
      %s50 = sphi 0, %s49
      %s66 = sphi 0, %s50
      %s78 = sphi 0, %s80
      %s81 = sphi 0, %s78
      %s82 = sphi 0, %s81
      %s98 = sphi 0, %s82
      %s110 = sphi 0, %s112
      %s113 = sphi 0, %s110
      %s114 = sphi 0, %s113
      %s130 = sphi 0, %s114
      %s136 = sphi 0, %s138
      %s139 = sphi 0, %s136
      %s140 = sphi 0, %s139
      %s156 = sphi 0, %s140
    $region4: #{tpu_custom_call.1} parent=1 // loop_header_branch
      %21 = sbr.rel (%p19) target = $region8
    $region5: #{tpu_custom_call.1} parent=1 // loop_body
      %s23 = ssub.s32 %s18, 1
      %s24 = ssub.s32 %s18, 2
      %s31 = sadd.s32 1, %s26
      %p32 = scmp.ge.s32.totalorder %s31, 1
      %s33 = scalar_select %p32, 0, %s31
      %s34 = sadd.s32 1, %s25
      %s35 = scalar_select %p32, %s34, %s25
      %p36 = scmp.ge.s32.totalorder %s35, 2
      %s37 = scalar_select %p36, 0, %s35
      %s38 = sadd.s32 %s25, %s26
      %p39 = scmp.lt.s32.totalorder %s38, 0
      %s40 = scalar_select %p39, %s38, 0
      %s41 = sadd.s32 %s37, %s33
      %p42 = scmp.lt.s32.totalorder %s41, 0
      %s43 = scalar_select %p42, %s41, 0
      %s44 = ssub.s32 %s40, %s43
      %p45 = scmp.eq.s32.totalorder %s44, 0
      %s47 = sadd.s32 %s46, 1
      %s48 = scalar_select %p45, %s46, %s47
      %p51 = pneg %p45
      %p52 = scmp.eq.s32.totalorder %s18, 1
      %p53 = por %p51, %p52
      %p54 = scmp.ne.s32.totalorder %s46, %s49
      %p55 = scmp.eq.s32.totalorder %s18, 0
      %p56 = por %p54, %p55
      %p57 = scmp.ne.s32.totalorder %s46, %s49
      %p58 = scmp.eq.s32.totalorder %s23, 1
      %p59 = por %p57, %p58
      %p60 = scmp.ne.s32.totalorder %s49, %s50
      %p61 = scmp.eq.s32.totalorder %s23, 0
      %p62 = por %p60, %p61
      %p63 = scmp.ne.s32.totalorder %s49, %s50
      %p64 = scmp.eq.s32.totalorder %s24, 1
      %p65 = por %p63, %p64
      %p67 = scmp.ne.s32.totalorder %s50, %s66
      %p68 = scmp.eq.s32.totalorder %s24, 0
      %p69 = por %p67, %p68
      %s70 = sadd.s32 %s25, %s26
      %p71 = scmp.lt.s32.totalorder %s70, 0
      %s72 = scalar_select %p71, %s70, 0
      %s73 = sadd.s32 %s37, %s33
      %p74 = scmp.lt.s32.totalorder %s73, 0
      %s75 = scalar_select %p74, %s73, 0
      %s76 = ssub.s32 %s72, %s75
      %p77 = scmp.eq.s32.totalorder %s76, 0
      %s79 = sadd.s32 %s78, 1
      %s80 = scalar_select %p77, %s78, %s79
      %p83 = pneg %p77
      %p84 = scmp.eq.s32.totalorder %s18, 1
      %p85 = por %p83, %p84
      %p86 = scmp.ne.s32.totalorder %s78, %s81
      %p87 = scmp.eq.s32.totalorder %s18, 0
      %p88 = por %p86, %p87
      %p89 = scmp.ne.s32.totalorder %s78, %s81
      %p90 = scmp.eq.s32.totalorder %s23, 1
      %p91 = por %p89, %p90
      %p92 = scmp.ne.s32.totalorder %s81, %s82
      %p93 = scmp.eq.s32.totalorder %s23, 0
      %p94 = por %p92, %p93
      %p95 = scmp.ne.s32.totalorder %s81, %s82
      %p96 = scmp.eq.s32.totalorder %s24, 1
      %p97 = por %p95, %p96
      %p99 = scmp.ne.s32.totalorder %s82, %s98
      %p100 = scmp.eq.s32.totalorder %s24, 0
      %p101 = por %p99, %p100
      %s102 = sadd.s32 %s25, %s26
      %p103 = scmp.lt.s32.totalorder %s102, 0
      %s104 = scalar_select %p103, %s102, 0
      %s105 = sadd.s32 %s37, %s33
      %p106 = scmp.lt.s32.totalorder %s105, 0
      %s107 = scalar_select %p106, %s105, 0
      %s108 = ssub.s32 %s104, %s107
      %p109 = scmp.eq.s32.totalorder %s108, 0
      %s111 = sadd.s32 %s110, 1
      %s112 = scalar_select %p109, %s110, %s111
      %p115 = pneg %p109
      %p116 = scmp.eq.s32.totalorder %s18, 1
      %p117 = por %p115, %p116
      %p118 = scmp.ne.s32.totalorder %s110, %s113
      %p119 = scmp.eq.s32.totalorder %s18, 0
      %p120 = por %p118, %p119
      %p121 = scmp.ne.s32.totalorder %s110, %s113
      %p122 = scmp.eq.s32.totalorder %s23, 1
      %p123 = por %p121, %p122
      %p124 = scmp.ne.s32.totalorder %s113, %s114
      %p125 = scmp.eq.s32.totalorder %s23, 0
      %p126 = por %p124, %p125
      %p127 = scmp.ne.s32.totalorder %s113, %s114
      %p128 = scmp.eq.s32.totalorder %s24, 1
      %p129 = por %p127, %p128
      %p131 = scmp.ne.s32.totalorder %s114, %s130
      %p132 = scmp.eq.s32.totalorder %s24, 0
      %p133 = por %p131, %p132
      %s134 = ssub.s32 %s25, %s37
      %p135 = scmp.eq.s32.totalorder %s134, 0
      %s137 = sadd.s32 %s136, 1
      %s138 = scalar_select %p135, %s136, %s137
      %p141 = pneg %p135
      %p142 = scmp.eq.s32.totalorder %s18, 1
      %p143 = por %p141, %p142
      %p144 = scmp.ne.s32.totalorder %s136, %s139
      %p145 = scmp.eq.s32.totalorder %s18, 0
      %p146 = por %p144, %p145
      %p147 = scmp.ne.s32.totalorder %s136, %s139
      %p148 = scmp.eq.s32.totalorder %s23, 1
      %p149 = por %p147, %p148
      %p150 = scmp.ne.s32.totalorder %s139, %s140
      %p151 = scmp.eq.s32.totalorder %s23, 0
      %p152 = por %p150, %p151
      %p153 = scmp.ne.s32.totalorder %s139, %s140
      %p154 = scmp.eq.s32.totalorder %s24, 1
      %p155 = por %p153, %p154
      %p157 = scmp.ne.s32.totalorder %s140, %s156
      %p158 = scmp.eq.s32.totalorder %s24, 0
      %p159 = por %p157, %p158
      %p160 = scmp.le.s32.totalorder 1, %s18
      %p161 = scmp.lt.s32.totalorder %s18, 3
      %p162 = pnand %p160, %p161
      %p163 = pneg %p162
      // Predicated region
      $region9: #{tpu_custom_call.1} parent=5 // pred_check
        _
      $region10: #{tpu_custom_call.1} parent=5 // pred_check_branch
        %165 = sbr.rel (%p162) target = $region12
      $region11: #{tpu_custom_call.1} parent=5 // pred_region
        %s166 = ssub.s32 %s18, 1
      $region12: #{tpu_custom_call.1} parent=5 // pred_fallthru
        _
      %p167 = scmp.lt.s32.totalorder %s18, 2
      // Predicated region
      $region13: #{tpu_custom_call.1} parent=5 // pred_check
        %p168 = pneg %p167
      $region14: #{tpu_custom_call.1} parent=5 // pred_check_branch
        %170 = sbr.rel (%p168) target = $region16
      $region15: #{tpu_custom_call.1} parent=5 // pred_region
        // Predicated region
        $region17: #{tpu_custom_call.1} parent=15 // pred_check
          %p171 = pneg %p56
        $region18: #{tpu_custom_call.1} parent=15 // pred_check_branch
          %173 = sbr.rel (%p171) target = $region20
        $region19: #{tpu_custom_call.1} parent=15 // pred_region
          %s174 = sand.u32 %s46, 1
          %s175 = scalar_lea.sflag [#allocation3], %s174
          %s176 = sand.u32 %s46, 1
          %s177 = smul.addr %s176, 32
          %s178 = scalar_lea.vmem [#allocation2], %s177
          %s179 = sadd.s32 %s25, %s26
          %p180 = scmp.lt.s32.totalorder %s179, 0
          %s181 = scalar_select %p180, %s179, 0
          %s182 = smul.u32 2, %s181
          %s183 = ssub.s32 1, %s182
          %s184 = smul.u32 64, %s183
          %s185 = smul.u32 %s184, 4
          %s187 = ssub.s32 512, %s185
          %188 = vsyncadd %s175, %s187
          %p189 = scmp.ne.s32.totalorder 0, %s185
          %s190 = smul.addr %s182, 4
          %s191 = smul.addr %s190, 64
          %s192 = scalar_lea.hbm %s0, %s191
          %s193 = smul.u32 16, %s183
          %s194 = sshll.u32 %s178, 4
          %s195 = int_to_ptr.vmem [resolvable:$true] %s194
          %s196 = sshll.u32 %s193, 4
          %200 = dma.hbm_to_vmem [thread:$0]  (%p189), %s192, %s196, %s195, %s175, 256, 256, 16
        $region20: #{tpu_custom_call.1} parent=15 // pred_fallthru
          _
        // Predicated region
        $region21: #{tpu_custom_call.1} parent=15 // pred_check
          %p201 = pneg %p88
        $region22: #{tpu_custom_call.1} parent=15 // pred_check_branch
          %203 = sbr.rel (%p201) target = $region24
        $region23: #{tpu_custom_call.1} parent=15 // pred_region
          %s204 = sand.u32 %s18, 1
          %s205 = scalar_lea.sflag [#allocation6], %s204
          %s206 = sand.u32 %s78, 1
          %s207 = smul.addr %s206, 32
          %s208 = scalar_lea.vmem [#allocation5], %s207
          %s209 = sadd.s32 %s25, %s26
          %p210 = scmp.lt.s32.totalorder %s209, 0
          %s211 = scalar_select %p210, %s209, 0
          %s212 = smul.u32 2, %s211
          %s213 = ssub.s32 1, %s212
          %s214 = smul.u32 64, %s213
          %s215 = smul.u32 %s214, 4
          %s217 = ssub.s32 512, %s215
          %218 = vsyncadd %s205, %s217
          %p219 = scmp.ne.s32.totalorder 0, %s215
          %s220 = smul.addr %s212, 4
          %s221 = smul.addr %s220, 64
          %s222 = scalar_lea.hbm %s1, %s221
          %s223 = smul.u32 16, %s213
          %s224 = sshll.u32 %s208, 4
          %s225 = int_to_ptr.vmem [resolvable:$true] %s224
          %s226 = sshll.u32 %s223, 4
          %230 = dma.hbm_to_vmem [thread:$0]  (%p219), %s222, %s226, %s225, %s205, 256, 256, 16
        $region24: #{tpu_custom_call.1} parent=15 // pred_fallthru
          _
        // Predicated region
        $region25: #{tpu_custom_call.1} parent=15 // pred_check
          %p231 = pneg %p120
        $region26: #{tpu_custom_call.1} parent=15 // pred_check_branch
          %233 = sbr.rel (%p231) target = $region28
        $region27: #{tpu_custom_call.1} parent=15 // pred_region
          %s234 = sand.u32 %s18, 1
          %s235 = scalar_lea.sflag [#allocation6], %s234
          %s236 = sand.u32 %s110, 1
          %s237 = smul.addr %s236, 32
          %s238 = scalar_lea.vmem [#allocation7], %s237
          %s239 = sadd.s32 %s25, %s26
          %p240 = scmp.lt.s32.totalorder %s239, 0
          %s241 = scalar_select %p240, %s239, 0
          %s242 = smul.u32 2, %s241
          %s243 = ssub.s32 1, %s242
          %s244 = smul.u32 64, %s243
          %s245 = smul.u32 %s244, 4
          %s247 = ssub.s32 512, %s245
          %248 = vsyncadd %s235, %s247
          %p249 = scmp.ne.s32.totalorder 0, %s245
          %s250 = smul.addr %s242, 4
          %s251 = smul.addr %s250, 64
          %s252 = scalar_lea.hbm %s2, %s251
          %s253 = smul.u32 16, %s243
          %s254 = sshll.u32 %s238, 4
          %s255 = int_to_ptr.vmem [resolvable:$true] %s254
          %s256 = sshll.u32 %s253, 4
          %260 = dma.hbm_to_vmem [thread:$0]  (%p249), %s252, %s256, %s255, %s235, 256, 256, 16
        $region28: #{tpu_custom_call.1} parent=15 // pred_fallthru
          _
      $region16: #{tpu_custom_call.1} parent=5 // pred_fallthru
        _
      %p261 = scmp.le.s32.totalorder 1, %s18
      %p262 = scmp.lt.s32.totalorder %s18, 3
      %p263 = pnand %p261, %p262
      %p264 = pneg %p263
      // Predicated region
      $region29: #{tpu_custom_call.1} parent=5 // pred_check
        _
      $region30: #{tpu_custom_call.1} parent=5 // pred_check_branch
        %266 = sbr.rel (%p263) target = $region32
      $region31: #{tpu_custom_call.1} parent=5 // pred_region
        %s267 = ssub.s32 %s18, 1
        %s268 = sand.u32 %s49, 1
        %s269 = scalar_lea.sflag [#allocation3], %s268
        %s270 = sand.u32 %s49, 1
        %s271 = smul.addr %s270, 32
        %s272 = scalar_lea.vmem [#allocation2], %s271
        // Predicated region
        $region33: #{tpu_custom_call.1} parent=31 // pred_check
          %p273 = pneg %p62
        $region34: #{tpu_custom_call.1} parent=31 // pred_check_branch
          %275 = sbr.rel (%p273) target = $region36
        $region35: #{tpu_custom_call.1} parent=31 // pred_region
          %276 = dma.done %s269, 512
        $region36: #{tpu_custom_call.1} parent=31 // pred_fallthru
          _
        %s277 = sand.u32 %s23, 1
        %s278 = scalar_lea.sflag [#allocation6], %s277
        %s279 = sand.u32 %s81, 1
        %s280 = smul.addr %s279, 32
        %s281 = scalar_lea.vmem [#allocation5], %s280
        // Predicated region
        $region37: #{tpu_custom_call.1} parent=31 // pred_check
          %p282 = pneg %p94
        $region38: #{tpu_custom_call.1} parent=31 // pred_check_branch
          %284 = sbr.rel (%p282) target = $region40
        $region39: #{tpu_custom_call.1} parent=31 // pred_region
          %285 = dma.done %s278, 512
        $region40: #{tpu_custom_call.1} parent=31 // pred_fallthru
          _
        %s286 = sand.u32 %s23, 1
        %s287 = scalar_lea.sflag [#allocation6], %s286
        %s288 = sand.u32 %s113, 1
        %s289 = smul.addr %s288, 32
        %s290 = scalar_lea.vmem [#allocation7], %s289
        // Predicated region
        $region41: #{tpu_custom_call.1} parent=31 // pred_check
          %p291 = pneg %p126
        $region42: #{tpu_custom_call.1} parent=31 // pred_check_branch
          %293 = sbr.rel (%p291) target = $region44
        $region43: #{tpu_custom_call.1} parent=31 // pred_region
          %294 = dma.done %s287, 512
        $region44: #{tpu_custom_call.1} parent=31 // pred_fallthru
          _
        %s295 = sand.u32 %s49, 1
        %s296 = scalar_lea.sflag [#allocation3], %s295
        %s297 = sand.u32 %s49, 1
        %s298 = smul.addr %s297, 32
        %s299 = scalar_lea.vmem [#allocation2], %s298
        %p300 = pneg %p62
        %p301 = pneg %p59
        %s302 = sand.u32 %s23, 1
        %s303 = scalar_lea.sflag [#allocation6], %s302
        %s304 = sand.u32 %s81, 1
        %s305 = smul.addr %s304, 32
        %s306 = scalar_lea.vmem [#allocation5], %s305
        %p307 = pneg %p94
        %p308 = pneg %p91
        %s309 = sand.u32 %s23, 1
        %s310 = scalar_lea.sflag [#allocation6], %s309
        %s311 = sand.u32 %s113, 1
        %s312 = smul.addr %s311, 32
        %s313 = scalar_lea.vmem [#allocation7], %s312
        %p314 = pneg %p126
        %p315 = pneg %p123
        %p316 = pneg %p152
        %p317 = pneg %p149
        %s318 = sand.u32 %s139, 1
        %s319 = scalar_lea.sflag [#allocation4], %s318
        %s320 = sand.u32 %s139, 1
        %s321 = smul.addr %s320, 32
        %s322 = scalar_lea.vmem [#allocation8], %s321
        %s323 = sadd.s32 %s27, %s28
        %p324 = scmp.lt.s32.totalorder %s323, 0
        %s325 = scalar_select %p324, %s323, 0
        %s326 = smul.u32 2, %s325
        %s327 = ssub.s32 1, %s326
        %s328 = smul.u32 64, %s327
        %s329 = smul.u32 %s328, 4
        %s330 = sadd.s32 %s27, %s28
        %p331 = scmp.lt.s32.totalorder %s330, 0
        %s332 = scalar_select %p331, %s330, 0
        %s333 = smul.u32 2, %s332
        %s334 = ssub.s32 1, %s333
        %s335 = smul.u32 64, %s334
        %s336 = smul.u32 %s335, 4
        %s337 = sadd.s32 %s27, %s28
        %p338 = scmp.lt.s32.totalorder %s337, 0
        %s339 = scalar_select %p338, %s337, 0
        %s340 = smul.u32 2, %s339
        %s341 = ssub.s32 1, %s340
        %s342 = smul.u32 64, %s341
        %s343 = smul.u32 %s342, 4
        %p344 = scmp.eq.s32.totalorder %s28, 0
        // Predicated region
        $region45: #{tpu_custom_call.1} parent=31 // pred_check
          %p345 = pneg %p344
        $region46: #{tpu_custom_call.1} parent=31 // pred_check_branch
          %347 = sbr.rel (%p345) target = $region48
        $region47: #{tpu_custom_call.1} parent=31 // pred_region
          %348 = vst [vmem:[%s322] sm:$0xff] 0.0
          %349 = vst [vmem:[%s322 + $0x8] sm:$0xff] 0.0
          %350 = vst [vmem:[%s322 + $0x10] sm:$0xff] 0.0
          %351 = vst [vmem:[%s322 + $0x18] sm:$0xff] 0.0
        $region48: #{tpu_custom_call.1} parent=31 // pred_fallthru
          _
        %v352 = vld [vmem:[%s272] sm:$0xff]
        %v353 = vld [vmem:[%s272 + $0x8] sm:$0xff]
        %v354 = vld [vmem:[%s272 + $0x10] sm:$0xff]
        %v355 = vld [vmem:[%s272 + $0x18] sm:$0xff]
        %v356 = vld [vmem:[%s281] sm:$0xff]
        %v357 = vld [vmem:[%s281 + $0x8] sm:$0xff]
        %v358 = vld [vmem:[%s281 + $0x10] sm:$0xff]
        %v359 = vld [vmem:[%s281 + $0x18] sm:$0xff]
        %v360 = vld [vmem:[%s290] sm:$0xff]
        %v361 = vld [vmem:[%s290 + $0x8] sm:$0xff]
        %v362 = vld [vmem:[%s290 + $0x10] sm:$0xff]
        %v363 = vld [vmem:[%s290 + $0x18] sm:$0xff]
        %v364 = vand.u32 2147483647, %v352
        %v365 = vand.u32 2147483647, %v353
        %v366 = vand.u32 2147483647, %v354
        %v367 = vand.u32 2147483647, %v355
        %v368 = vsub.f32 0.0, %v364
        %v369 = vsub.f32 0.0, %v365
        %v370 = vsub.f32 0.0, %v366
        %v371 = vsub.f32 0.0, %v367
        %v372 = vmul.f32 %v368, 1.442695
        %v373 = vpow.pop %v372
        %v374 = vmul.f32 %v369, 1.442695
        %v375 = vpow.pop %v374
        %v376 = vmul.f32 %v370, 1.442695
        %v377 = vpow.pop %v376
        %v378 = vmul.f32 %v371, 1.442695
        %v379 = vpow.pop %v378
        %v380 = vadd.f32 %v373, 1.0
        %v381 = vlog2.pop %v380
        %v382 = vmul.f32 %v381, 0.6931472
        %v383 = vmul.f32 -0.5, %v373
        %v384 = vadd.f32 %v383, 1.0
        %v385 = vmul.f32 %v384, %v373
        %v386 = vand.u32 2147483647, %v373
        %vm387 = vcmp.lt.f32.partialorder %v386, 0.0004427343
        %v388 = vsel %vm387, %v385, %v382
        %v389 = vadd.f32 %v375, 1.0
        %v390 = vlog2.pop %v389
        %v391 = vmul.f32 %v390, 0.6931472
        %v392 = vmul.f32 -0.5, %v375
        %v393 = vadd.f32 %v392, 1.0
        %v394 = vmul.f32 %v393, %v375
        %v395 = vand.u32 2147483647, %v375
        %vm396 = vcmp.lt.f32.partialorder %v395, 0.0004427343
        %v397 = vsel %vm396, %v394, %v391
        %v398 = vadd.f32 %v377, 1.0
        %v399 = vlog2.pop %v398
        %v400 = vmul.f32 %v399, 0.6931472
        %v401 = vmul.f32 -0.5, %v377
        %v402 = vadd.f32 %v401, 1.0
        %v403 = vmul.f32 %v402, %v377
        %v404 = vand.u32 2147483647, %v377
        %vm405 = vcmp.lt.f32.partialorder %v404, 0.0004427343
        %v406 = vsel %vm405, %v403, %v400
        %v407 = vadd.f32 %v379, 1.0
        %v408 = vlog2.pop %v407
        %v409 = vmul.f32 %v408, 0.6931472
        %v410 = vmul.f32 -0.5, %v379
        %v411 = vadd.f32 %v410, 1.0
        %v412 = vmul.f32 %v411, %v379
        %v413 = vand.u32 2147483647, %v379
        %vm414 = vcmp.lt.f32.partialorder %v413, 0.0004427343
        %v415 = vsel %vm414, %v412, %v409
        %v416 = vadd.f32 %v373, 1.0
        %v417 = vadd.f32 %v375, 1.0
        %v418 = vadd.f32 %v377, 1.0
        %v419 = vadd.f32 %v379, 1.0
        %v420 = vrcp.pop %v416
        %v421 = vrcp.pop %v417
        %v422 = vrcp.pop %v418
        %v423 = vrcp.pop %v419
        %vm424 = vcmp.ge.f32.partialorder %v352, 0.0
        %vm425 = vcmp.ge.f32.partialorder %v353, 0.0
        %vm426 = vcmp.ge.f32.partialorder %v354, 0.0
        %vm427 = vcmp.ge.f32.partialorder %v355, 0.0
        %v428 = vmul.f32 %v373, %v420
        %v429 = vmul.f32 %v375, %v421
        %v430 = vmul.f32 %v377, %v422
        %v431 = vmul.f32 %v379, %v423
        %v432 = vsel %vm424, %v420, %v428
        %v433 = vsel %vm425, %v421, %v429
        %v434 = vsel %vm426, %v422, %v430
        %v435 = vsel %vm427, %v423, %v431
        %v436 = vmul.f32 %v432, %v432
        %v437 = vmul.f32 %v433, %v433
        %v438 = vmul.f32 %v434, %v434
        %v439 = vmul.f32 %v435, %v435
        %v440 = vmul.f32 %v436, 0.75
        %v441 = vmul.f32 %v437, 0.75
        %v442 = vmul.f32 %v438, 0.75
        %v443 = vmul.f32 %v439, 0.75
        %v444 = vsub.f32 1.0, %v360
        %v445 = vsub.f32 1.0, %v361
        %v446 = vsub.f32 1.0, %v362
        %v447 = vsub.f32 1.0, %v363
        %v448 = vmul.f32 %v440, %v444
        %v449 = vmul.f32 %v441, %v445
        %v450 = vmul.f32 %v442, %v446
        %v451 = vmul.f32 %v443, %v447
        %v452 = vmul.f32 %v356, %v360
        %v453 = vmul.f32 %v357, %v361
        %v454 = vmul.f32 %v358, %v362
        %v455 = vmul.f32 %v359, %v363
        %v456 = vadd.f32 %v448, %v452
        %v457 = vadd.f32 %v449, %v453
        %v458 = vadd.f32 %v450, %v454
        %v459 = vadd.f32 %v451, %v455
        %v460 = vmax.f32 %v352, 0.0
        %v461 = vmax.f32 %v353, 0.0
        %v462 = vmax.f32 %v354, 0.0
        %v463 = vmax.f32 %v355, 0.0
        %v464 = vmul.f32 %v352, %v356
        %v465 = vmul.f32 %v353, %v357
        %v466 = vmul.f32 %v354, %v358
        %v467 = vmul.f32 %v355, %v359
        %v468 = vsub.f32 %v460, %v464
        %v469 = vsub.f32 %v461, %v465
        %v470 = vsub.f32 %v462, %v466
        %v471 = vsub.f32 %v463, %v467
        %v472 = vadd.f32 %v468, %v388
        %v473 = vadd.f32 %v469, %v397
        %v474 = vadd.f32 %v470, %v406
        %v475 = vadd.f32 %v471, %v415
        %v476 = vmul.f32 %v472, %v456
        %v477 = vmul.f32 %v473, %v457
        %v478 = vmul.f32 %v474, %v458
        %v479 = vmul.f32 %v475, %v459
        %s480 = sadd.s32 %s27, %s28
        %s481 = smul.u32 %s480, 8
        %s482 = sadd.s32 %s481, 8
        %p483 = scmp.le.s32.totalorder %s482, 4
        // Predicated region
        $region49: #{tpu_custom_call.1} parent=31 // pred_check
          %p484 = pneg %p483
        $region50: #{tpu_custom_call.1} parent=31 // pred_check_branch
          %486 = sbr.rel (%p484) target = $region52
        $region51: #{tpu_custom_call.1} parent=31 // pred_region
          %v487 = vld [vmem:[%s322] sm:$0xff]
          %v488 = vld [vmem:[%s322 + $0x8] sm:$0xff]
          %v489 = vld [vmem:[%s322 + $0x10] sm:$0xff]
          %v490 = vld [vmem:[%s322 + $0x18] sm:$0xff]
          %v491 = vadd.f32 %v476, 0.0
          %v492 = vadd.f32 %v477, 0.0
          %v493 = vadd.f32 %v478, 0.0
          %v494 = vadd.f32 %v479, 0.0
          %v499 = vcombine.low %v491, %v493
          %v500 = vcombine.high %v491, %v493
          %v501 = vcombine.low %v492, %v494
          %v502 = vcombine.high %v492, %v494
          %v507 = vadd.f32 %v487, %v499
          %v508 = vadd.f32 %v488, %v500
          %v509 = vadd.f32 %v489, %v501
          %v510 = vadd.f32 %v490, %v502
          %511 = vst [vmem:[%s322] sm:$0xff] %v507
          %512 = vst [vmem:[%s322 + $0x8] sm:$0xff] %v508
          %513 = vst [vmem:[%s322 + $0x10] sm:$0xff] %v509
          %514 = vst [vmem:[%s322 + $0x18] sm:$0xff] %v510
        $region52: #{tpu_custom_call.1} parent=31 // pred_fallthru
          _
        %p515 = scmp.gt.s32.totalorder %s482, 4
        // Predicated region
        $region53: #{tpu_custom_call.1} parent=31 // pred_check
          %p516 = pneg %p515
        $region54: #{tpu_custom_call.1} parent=31 // pred_check_branch
          %518 = sbr.rel (%p516) target = $region56
        $region55: #{tpu_custom_call.1} parent=31 // pred_region
          %v519 = vlaneseq
          %v520 = vshrl.u32 %v519, 7
          %v521 = vstv %s481
          %v522 = vadd.s32 %v520, %v521
          %vm523 = vcmp.lt.s32.totalorder %v522, 4
          %v528 = vcombine.low %v476, %v478
          %v529 = vcombine.high %v476, %v478
          %v530 = vcombine.low %v477, %v479
          %v531 = vcombine.high %v477, %v479
          %v536 = vsel %vm523, %v528, 0.0
          %v537 = vsel %vm523, %v529, 0.0
          %v538 = vsel %vm523, %v530, 0.0
          %v539 = vsel %vm523, %v531, 0.0
          %v540 = vld [vmem:[%s322] sm:$0xff]
          %v541 = vld [vmem:[%s322 + $0x8] sm:$0xff]
          %v542 = vld [vmem:[%s322 + $0x10] sm:$0xff]
          %v543 = vld [vmem:[%s322 + $0x18] sm:$0xff]
          %v544 = vadd.f32 %v536, 0.0
          %v545 = vadd.f32 %v537, 0.0
          %v546 = vadd.f32 %v538, 0.0
          %v547 = vadd.f32 %v539, 0.0
          %v548 = vadd.f32 %v540, %v544
          %v549 = vadd.f32 %v541, %v545
          %v550 = vadd.f32 %v542, %v546
          %v551 = vadd.f32 %v543, %v547
          %552 = vst [vmem:[%s322] sm:$0xff] %v548
          %553 = vst [vmem:[%s322 + $0x8] sm:$0xff] %v549
          %554 = vst [vmem:[%s322 + $0x10] sm:$0xff] %v550
          %555 = vst [vmem:[%s322 + $0x18] sm:$0xff] %v551
        $region56: #{tpu_custom_call.1} parent=31 // pred_fallthru
          _
        %s556 = sand.u32 %s139, 1
        %s557 = scalar_lea.sflag [#allocation4], %s556
        %s558 = sand.u32 %s139, 1
        %s559 = smul.addr %s558, 32
        %s560 = scalar_lea.vmem [#allocation8], %s559
        // Predicated region
        $region57: #{tpu_custom_call.1} parent=31 // pred_check
          %p561 = pneg %p149
        $region58: #{tpu_custom_call.1} parent=31 // pred_check_branch
          %563 = sbr.rel (%p561) target = $region60
        $region59: #{tpu_custom_call.1} parent=31 // pred_region
          %s565 = ssub.s32 512, 512
          %566 = vsyncadd %s557, %s565
          %s567 = smul.addr %s27, 4
          %s568 = smul.addr %s567, 128
          %s569 = scalar_lea.hbm %s3, %s568
          %s571 = sshll.u32 %s560, 4
          %s572 = int_to_ptr.vmem [resolvable:$true] %s571
          %574 = dma.vmem_to_hbm [thread:$0]  %s572, 512, %s569, %s557
        $region60: #{tpu_custom_call.1} parent=31 // pred_fallthru
          _
      $region32: #{tpu_custom_call.1} parent=5 // pred_fallthru
        _
      %p575 = scmp.le.s32.totalorder 2, %s18
      // Predicated region
      $region61: #{tpu_custom_call.1} parent=5 // pred_check
        %p576 = pneg %p575
      $region62: #{tpu_custom_call.1} parent=5 // pred_check_branch
        %578 = sbr.rel (%p576) target = $region64
      $region63: #{tpu_custom_call.1} parent=5 // pred_region
        %s579 = ssub.s32 %s18, 2
        // Predicated region
        $region65: #{tpu_custom_call.1} parent=63 // pred_check
          %p580 = pneg %p155
        $region66: #{tpu_custom_call.1} parent=63 // pred_check_branch
          %582 = sbr.rel (%p580) target = $region68
        $region67: #{tpu_custom_call.1} parent=63 // pred_region
          %s583 = sand.u32 %s140, 1
          %s584 = scalar_lea.sflag [#allocation4], %s583
          %s585 = sand.u32 %s140, 1
          %s586 = smul.addr %s585, 32
          %s587 = scalar_lea.vmem [#allocation8], %s586
          %588 = dma.done %s584, 512
        $region68: #{tpu_custom_call.1} parent=63 // pred_fallthru
          _
      $region64: #{tpu_custom_call.1} parent=5 // pred_fallthru
        _
    $region6: #{tpu_custom_call.1} parent=1 // loop_footer
      %s22 = sadd.s32 1, %s18
    $region7: #{tpu_custom_call.1} parent=1 // loop_footer_branch
      %17 = sbr.rel target = $region3
    $region8: #{tpu_custom_call.1} parent=1 // loop_exit
      _
    %589 = vsyncpa [#allocation3], 1
    %s590 = scalar_lea.sflag [#allocation3], 1
    %591 = vsyncpa %s590, 1
    %592 = vsyncpa [#allocation6], 1
    %s593 = scalar_lea.sflag [#allocation6], 1
    %594 = vsyncpa %s593, 1
    %595 = vsyncpa [#allocation4], 1
    %s596 = scalar_lea.sflag [#allocation4], 1
    %597 = vsyncpa %s596, 1

</llo_original>
